<compile_context>
chip_gen: v7x
topology: tpu7x:2x2x1
jax: 0.10.0
libtpu: 0.0.40
codegen_flags: <defaults>
</compile_context>

<pallas_src>
import functools

import jax
import jax.numpy as jnp
from jax import lax
from jax.experimental import pallas as pl
from jax.experimental.pallas import tpu as pltpu


def _pool_attn_kernel(x_ref, o_ref, *, pool_size, H, W):
    """avg_pool2d(x, k, stride=1, pad=k//2, count_include_pad=True) - x for a
    block of shape (1, gb*H, cp*W): gb planes stacked along the sublane axis,
    cp planes packed along the lane axis."""
    k = pool_size
    p = k // 2
    R, L = x_ref.shape[-2], x_ref.shape[-1]

    x = x_ref[0].astype(jnp.float32)                           # (R, L)

    # Hoisted per-plane coordinates (built once per grid step, not per shift).
    row_in_plane = lax.broadcasted_iota(jnp.int32, (R, 1), 0) % H
    col_in_plane = lax.broadcasted_iota(jnp.int32, (1, L), 1) % W

    # Vertical (H) pass: sublane shifts; zero-padding via 0/1 float masks.
    acc = x                                                    # a == 0 term
    for a in range(-p, p + 1):
        if a == 0:
            continue
        m = ((row_in_plane + a >= 0) & (row_in_plane + a < H)).astype(jnp.float32)
        acc = acc + jnp.roll(x, shift=-a, axis=0) * m

    # Horizontal (W) pass: lane shifts over the vertical partial sums.
    out = acc                                                  # b == 0 term
    for b in range(-p, p + 1):
        if b == 0:
            continue
        m = ((col_in_plane + b >= 0) & (col_in_plane + b < W)).astype(jnp.float32)
        out = out + jnp.roll(acc, shift=-b, axis=1) * m

    pooled = out * (1.0 / float(k * k))                        # count_include_pad=True
    o_ref[0] = (pooled - x).astype(o_ref.dtype)


def _choose_packing(B, H, W, itemsize):
    """Pick (cp, gb): cp planes packed along lanes, gb plane-groups stacked
    along sublanes.  Prefers lane counts that are multiples of 128 (unmasked
    stores) and keeps blocks <= ~1 MiB so double-buffered in/out plus f32
    temporaries fit in scoped VMEM on every TPU generation."""
    lane_cap = 512                       # keep rows a handful of vregs wide
    cp = 1
    cp_mult128 = None
    for d in range(1, B + 1):
        if B % d == 0 and d * W <= max(lane_cap, W):
            cp = d
            if (d * W) % 128 == 0:
                cp_mult128 = d
    if cp_mult128 is not None:
        cp = cp_mult128
    G = B // cp
    block_budget = 1 << 20               # bytes per block (f32 compute size)
    gb = 1
    for d in range(1, G + 1):
        if G % d == 0 and d * H * cp * W * max(itemsize, 4) <= block_budget:
            gb = d
    return cp, gb


def pool_attention(x, pool_size=3):
    """Pallas equivalent of Attention.forward: returns (pool(x) - x, None)."""
    assert pool_size % 2 == 1, "pool_size must be odd so output shape == input shape"
    N, C, H, W = x.shape
    B = N * C                            # independent spatial planes
    itemsize = jnp.dtype(x.dtype).itemsize
    cp, gb = _choose_packing(B, H, W, itemsize)
    G = B // cp                          # plane groups
    NG = G // gb                         # grid extent
    R, L = gb * H, cp * W                # block sublanes / lanes

    # Lane-dense packing: (N, C, H, W) -> (NG, gb*H, cp*W) with
    # packed[g, jg*H + h, j*W + w] = plane[(g*gb + jg)*cp + j, h, w].
    x_packed = (x.reshape(NG, gb, cp, H, W)
                  .transpose(0, 1, 3, 2, 4)
                  .reshape(NG, R, L))

    kernel = functools.partial(_pool_attn_kernel, pool_size=pool_size, H=H, W=W)
    cost = pl.CostEstimate(
        flops=int(4 * pool_size) * N * C * H * W,
        transcendentals=0,
        bytes_accessed=2 * N * C * H * W * itemsize,
    )
    out_packed = pl.pallas_call(
        kernel,
        out_shape=jax.ShapeDtypeStruct((NG, R, L), x.dtype),
        grid_spec=pltpu.PrefetchScalarGridSpec(
            num_scalar_prefetch=0,
            grid=(NG,),
            in_specs=[pl.BlockSpec((1, R, L), lambda g: (g, 0, 0))],
            out_specs=pl.BlockSpec((1, R, L), lambda g: (g, 0, 0)),
        ),
        compiler_params=pltpu.CompilerParams(
            dimension_semantics=("parallel",),
            vmem_limit_bytes=32 * 1024 * 1024,
        ),
        cost_estimate=cost,
    )(x_packed)

    # Undo the packing: (NG, gb*H, cp*W) -> (N, C, H, W).
    out = (out_packed.reshape(NG, gb, H, cp, W)
                     .transpose(0, 1, 3, 2, 4)
                     .reshape(N, C, H, W))
    return out, None


def _reference(x, pool_size=3):
    """Pure-JAX reference matching torch.nn.AvgPool2d(k, stride=1, pad=k//2)."""
    p = pool_size // 2
    summed = lax.reduce_window(
        x, 0.0, lax.add,
        window_dimensions=(1, 1, pool_size, pool_size),
        window_strides=(1, 1, 1, 1),
        padding=[(0, 0), (0, 0), (p, p), (p, p)],
    )
    return summed / float(pool_size * pool_size) - x


if __name__ == "__main__":
    key = jax.random.PRNGKey(0)
    k1, k2 = jax.random.split(key)
    # Small NCHW feature map consistent with the module's forward.
    x = jax.random.normal(k1, (2, 4, 16, 16), dtype=jnp.float32)

    out, attn = pool_attention(x, pool_size=3)
    out = jax.block_until_ready(out)
    ref = _reference(x, pool_size=3)
    assert attn is None
    assert out.shape == x.shape and out.dtype == x.dtype
    assert jnp.allclose(out, ref, atol=1e-5, rtol=1e-5), "pool_size=3 mismatch"

    # Larger window exercises the p=2 boundary masks.
    out5, _ = pool_attention(x, pool_size=5)
    out5 = jax.block_until_ready(out5)
    assert jnp.allclose(out5, _reference(x, pool_size=5), atol=1e-5, rtol=1e-5), \
        "pool_size=5 mismatch"

    # Non-power-of-two channel count (lane packing with cp*W < 128 still works).
    x3 = jax.random.normal(k2, (1, 3, 16, 16), dtype=jnp.float32)
    out3, _ = pool_attention(x3, pool_size=3)
    out3 = jax.block_until_ready(out3)
    assert jnp.allclose(out3, _reference(x3, pool_size=3), atol=1e-5, rtol=1e-5), \
        "C=3 mismatch"

    # meta_former=True uses Attention(1): pool is identity, output must be 0.
    out1, _ = pool_attention(x, pool_size=1)
    out1 = jax.block_until_ready(out1)
    assert jnp.allclose(out1, jnp.zeros_like(x), atol=1e-6), "pool_size=1 must be zero"

    print("KERNEL_OK")
</pallas_src>

<mosaic_0001>
module attributes {stable_mosaic.version = 11 : i64} {
  func.func @_pool_attn_kernel(%arg0: i32, %arg1: memref<1x16x128xf32, #tpu.memory_space<vmem>>, %arg2: memref<1x16x128xf32, #tpu.memory_space<vmem>>) attributes {dimension_semantics = [#tpu.dimension_semantics<parallel>], iteration_bounds = array<i64: 1>, scalar_prefetch = 0 : i64, scratch_operands = 0 : i64, tpu.core_type = #tpu.core_type<tc>, window_params = [{transform_indices = @transform_0, window_bounds = array<i64: 1, 16, 128>}, {transform_indices = @transform_1, window_bounds = array<i64: 1, 16, 128>}]} {
    %c0 = arith.constant 0 : index
    %c0_0 = arith.constant 0 : index
    %c0_1 = arith.constant 0 : index
    %0 = vector.load %arg1[%c0, %c0_0, %c0_1] : memref<1x16x128xf32, #tpu.memory_space<vmem>>, vector<1x16x128xf32>
    %1 = vector.shape_cast %0 : vector<1x16x128xf32> to vector<16x128xf32>
    %2 = tpu.iota {dimensions = array<i32: 0>} : vector<16x1xi32>
    %c16_i32 = arith.constant 16 : i32
    %c0_i32 = arith.constant 0 : i32
    %3 = arith.cmpi eq, %c16_i32, %c0_i32 : i32
    %c1_i32 = arith.constant 1 : i32
    %4 = arith.select %3, %c1_i32, %c16_i32 : i32
    %5 = vector.broadcast %4 : i32 to vector<16x1xi32>
    %6 = arith.remsi %2, %5 : vector<16x1xi32>
    %c0_i32_2 = arith.constant 0 : i32
    %7 = vector.broadcast %c0_i32_2 : i32 to vector<16x1xi32>
    %8 = arith.cmpi ne, %6, %7 : vector<16x1xi32>
    %c0_i32_3 = arith.constant 0 : i32
    %9 = vector.broadcast %c0_i32_3 : i32 to vector<16x1xi32>
    %10 = arith.cmpi slt, %6, %9 : vector<16x1xi32>
    %c0_i32_4 = arith.constant 0 : i32
    %11 = arith.cmpi slt, %4, %c0_i32_4 : i32
    %12 = vector.broadcast %11 : i1 to vector<16x1xi1>
    %13 = vector.broadcast %12 : vector<16x1xi1> to vector<16x1xi1>
    %14 = arith.xori %10, %13 : vector<16x1xi1>
    %15 = arith.andi %14, %8 : vector<16x1xi1>
    %16 = vector.broadcast %4 : i32 to vector<16x1xi32>
    %17 = arith.addi %6, %16 : vector<16x1xi32>
    %18 = arith.select %15, %17, %6 : vector<16x1xi1>, vector<16x1xi32>
    %19 = tpu.iota {dimensions = array<i32: 1>} : vector<1x128xi32>
    %c16_i32_5 = arith.constant 16 : i32
    %c0_i32_6 = arith.constant 0 : i32
    %20 = arith.cmpi eq, %c16_i32_5, %c0_i32_6 : i32
    %c1_i32_7 = arith.constant 1 : i32
    %21 = arith.select %20, %c1_i32_7, %c16_i32_5 : i32
    %22 = vector.broadcast %21 : i32 to vector<1x128xi32>
    %23 = arith.remsi %19, %22 : vector<1x128xi32>
    %c0_i32_8 = arith.constant 0 : i32
    %24 = vector.broadcast %c0_i32_8 : i32 to vector<1x128xi32>
    %25 = arith.cmpi ne, %23, %24 : vector<1x128xi32>
    %c0_i32_9 = arith.constant 0 : i32
    %26 = vector.broadcast %c0_i32_9 : i32 to vector<1x128xi32>
    %27 = arith.cmpi slt, %23, %26 : vector<1x128xi32>
    %c0_i32_10 = arith.constant 0 : i32
    %28 = arith.cmpi slt, %21, %c0_i32_10 : i32
    %29 = vector.broadcast %28 : i1 to vector<1x128xi1>
    %30 = vector.broadcast %29 : vector<1x128xi1> to vector<1x128xi1>
    %31 = arith.xori %27, %30 : vector<1x128xi1>
    %32 = arith.andi %31, %25 : vector<1x128xi1>
    %33 = vector.broadcast %21 : i32 to vector<1x128xi32>
    %34 = arith.addi %23, %33 : vector<1x128xi32>
    %35 = arith.select %32, %34, %23 : vector<1x128xi1>, vector<1x128xi32>
    %c-1_i32 = arith.constant -1 : i32
    %36 = vector.broadcast %c-1_i32 : i32 to vector<16x1xi32>
    %37 = arith.addi %18, %36 : vector<16x1xi32>
    %c0_i32_11 = arith.constant 0 : i32
    %38 = vector.broadcast %c0_i32_11 : i32 to vector<16x1xi32>
    %39 = arith.cmpi sge, %37, %38 : vector<16x1xi32>
    %c-1_i32_12 = arith.constant -1 : i32
    %40 = vector.broadcast %c-1_i32_12 : i32 to vector<16x1xi32>
    %41 = arith.addi %18, %40 : vector<16x1xi32>
    %c16_i32_13 = arith.constant 16 : i32
    %42 = vector.broadcast %c16_i32_13 : i32 to vector<16x1xi32>
    %43 = arith.cmpi slt, %41, %42 : vector<16x1xi32>
    %44 = arith.andi %39, %43 : vector<16x1xi1>
    %45 = arith.extui %44 : vector<16x1xi1> to vector<16x1xi32>
    %46 = arith.sitofp %45 : vector<16x1xi32> to vector<16x1xf32>
    %47 = vector.extract_strided_slice %1 {offsets = [15, 0], sizes = [1, 128], strides = [1, 1]} : vector<16x128xf32> to vector<1x128xf32>
    %48 = vector.extract_strided_slice %1 {offsets = [0, 0], sizes = [15, 128], strides = [1, 1]} : vector<16x128xf32> to vector<15x128xf32>
    %49 = tpu.concatenate %47, %48 in 0 : vector<1x128xf32>, vector<15x128xf32> -> vector<16x128xf32>
    %50 = vector.broadcast %46 : vector<16x1xf32> to vector<16x128xf32>
    %51 = arith.mulf %49, %50 : vector<16x128xf32>
    %52 = arith.addf %1, %51 : vector<16x128xf32>
    %c1_i32_14 = arith.constant 1 : i32
    %53 = vector.broadcast %c1_i32_14 : i32 to vector<16x1xi32>
    %54 = arith.addi %18, %53 : vector<16x1xi32>
    %c0_i32_15 = arith.constant 0 : i32
    %55 = vector.broadcast %c0_i32_15 : i32 to vector<16x1xi32>
    %56 = arith.cmpi sge, %54, %55 : vector<16x1xi32>
    %c1_i32_16 = arith.constant 1 : i32
    %57 = vector.broadcast %c1_i32_16 : i32 to vector<16x1xi32>
    %58 = arith.addi %18, %57 : vector<16x1xi32>
    %c16_i32_17 = arith.constant 16 : i32
    %59 = vector.broadcast %c16_i32_17 : i32 to vector<16x1xi32>
    %60 = arith.cmpi slt, %58, %59 : vector<16x1xi32>
    %61 = arith.andi %56, %60 : vector<16x1xi1>
    %62 = arith.extui %61 : vector<16x1xi1> to vector<16x1xi32>
    %63 = arith.sitofp %62 : vector<16x1xi32> to vector<16x1xf32>
    %64 = vector.extract_strided_slice %1 {offsets = [1, 0], sizes = [15, 128], strides = [1, 1]} : vector<16x128xf32> to vector<15x128xf32>
    %65 = vector.extract_strided_slice %1 {offsets = [0, 0], sizes = [1, 128], strides = [1, 1]} : vector<16x128xf32> to vector<1x128xf32>
    %66 = tpu.concatenate %64, %65 in 0 : vector<15x128xf32>, vector<1x128xf32> -> vector<16x128xf32>
    %67 = vector.broadcast %63 : vector<16x1xf32> to vector<16x128xf32>
    %68 = arith.mulf %66, %67 : vector<16x128xf32>
    %69 = arith.addf %52, %68 : vector<16x128xf32>
    %c-1_i32_18 = arith.constant -1 : i32
    %70 = vector.broadcast %c-1_i32_18 : i32 to vector<1x128xi32>
    %71 = arith.addi %35, %70 : vector<1x128xi32>
    %c0_i32_19 = arith.constant 0 : i32
    %72 = vector.broadcast %c0_i32_19 : i32 to vector<1x128xi32>
    %73 = arith.cmpi sge, %71, %72 : vector<1x128xi32>
    %c-1_i32_20 = arith.constant -1 : i32
    %74 = vector.broadcast %c-1_i32_20 : i32 to vector<1x128xi32>
    %75 = arith.addi %35, %74 : vector<1x128xi32>
    %c16_i32_21 = arith.constant 16 : i32
    %76 = vector.broadcast %c16_i32_21 : i32 to vector<1x128xi32>
    %77 = arith.cmpi slt, %75, %76 : vector<1x128xi32>
    %78 = arith.andi %73, %77 : vector<1x128xi1>
    %79 = arith.extui %78 : vector<1x128xi1> to vector<1x128xi32>
    %80 = arith.sitofp %79 : vector<1x128xi32> to vector<1x128xf32>
    %81 = vector.extract_strided_slice %69 {offsets = [0, 127], sizes = [16, 1], strides = [1, 1]} : vector<16x128xf32> to vector<16x1xf32>
    %82 = vector.extract_strided_slice %69 {offsets = [0, 0], sizes = [16, 127], strides = [1, 1]} : vector<16x128xf32> to vector<16x127xf32>
    %83 = tpu.concatenate %81, %82 in 1 : vector<16x1xf32>, vector<16x127xf32> -> vector<16x128xf32>
    %84 = vector.broadcast %80 : vector<1x128xf32> to vector<16x128xf32>
    %85 = arith.mulf %83, %84 : vector<16x128xf32>
    %86 = arith.addf %69, %85 : vector<16x128xf32>
    %c1_i32_22 = arith.constant 1 : i32
    %87 = vector.broadcast %c1_i32_22 : i32 to vector<1x128xi32>
    %88 = arith.addi %35, %87 : vector<1x128xi32>
    %c0_i32_23 = arith.constant 0 : i32
    %89 = vector.broadcast %c0_i32_23 : i32 to vector<1x128xi32>
    %90 = arith.cmpi sge, %88, %89 : vector<1x128xi32>
    %c1_i32_24 = arith.constant 1 : i32
    %91 = vector.broadcast %c1_i32_24 : i32 to vector<1x128xi32>
    %92 = arith.addi %35, %91 : vector<1x128xi32>
    %c16_i32_25 = arith.constant 16 : i32
    %93 = vector.broadcast %c16_i32_25 : i32 to vector<1x128xi32>
    %94 = arith.cmpi slt, %92, %93 : vector<1x128xi32>
    %95 = arith.andi %90, %94 : vector<1x128xi1>
    %96 = arith.extui %95 : vector<1x128xi1> to vector<1x128xi32>
    %97 = arith.sitofp %96 : vector<1x128xi32> to vector<1x128xf32>
    %98 = vector.extract_strided_slice %69 {offsets = [0, 1], sizes = [16, 127], strides = [1, 1]} : vector<16x128xf32> to vector<16x127xf32>
    %99 = vector.extract_strided_slice %69 {offsets = [0, 0], sizes = [16, 1], strides = [1, 1]} : vector<16x128xf32> to vector<16x1xf32>
    %100 = tpu.concatenate %98, %99 in 1 : vector<16x127xf32>, vector<16x1xf32> -> vector<16x128xf32>
    %101 = vector.broadcast %97 : vector<1x128xf32> to vector<16x128xf32>
    %102 = arith.mulf %100, %101 : vector<16x128xf32>
    %103 = arith.addf %86, %102 : vector<16x128xf32>
    %cst = arith.constant 0.111111112 : f32
    %104 = vector.broadcast %cst : f32 to vector<16x128xf32>
    %105 = arith.mulf %103, %104 : vector<16x128xf32>
    %106 = arith.subf %105, %1 : vector<16x128xf32>
    %c0_26 = arith.constant 0 : index
    %c0_27 = arith.constant 0 : index
    %c0_28 = arith.constant 0 : index
    %107 = vector.load %arg2[%c0_26, %c0_27, %c0_28] : memref<1x16x128xf32, #tpu.memory_space<vmem>>, vector<1x16x128xf32>
    %108 = vector.shape_cast %107 : vector<1x16x128xf32> to vector<16x128xf32>
    %109 = vector.shape_cast %106 : vector<16x128xf32> to vector<1x16x128xf32>
    tpu.vector_store %arg2[%c0_26, %c0_27, %c0_28], %109 {strides = array<i32>} : memref<1x16x128xf32, #tpu.memory_space<vmem>>, vector<1x16x128xf32>,
    return
  }
  func.func @transform_0(%arg0: i32) -> (i32, i32, i32) {
    %c0_i32 = arith.constant 0 : i32
    %c0_i32_0 = arith.constant 0 : i32
    %c0_i32_1 = arith.constant 0 : i32
    return %arg0, %c0_i32, %c0_i32_0 : i32, i32, i32
  }
  func.func @transform_1(%arg0: i32) -> (i32, i32, i32) {
    %c0_i32 = arith.constant 0 : i32
    %c0_i32_0 = arith.constant 0 : i32
    %c0_i32_1 = arith.constant 0 : i32
    return %arg0, %c0_i32, %c0_i32_0 : i32, i32, i32
  }
}

</mosaic_0001>

<llo_original>
// kernel: tpu_custom_call.1
$region0: #{tpu_custom_call.1}
  #allocation0 [shape = 'u32[]', space=smem, size = 0x4, offset = 0x4, fixed_abs, tag = 'smem constant byte address 0x4 - core index']
  #allocation1 [shape = 'u32[144,128]{1,0:T(1,128)}', space=vmem, size = 0x12000, scoped, tag = 'internal scratch']
  %s0 = inlined_call_operand.hbm [shape: f32[1,16,128], index: 0, kind: input, shape index: {}]
  %s1 = inlined_call_operand.hbm [shape: f32[1,16,128], index: 1, kind: output, shape index: {}]
  %s2 = sld [smem:[#allocation0]]
  $region18: #{tpu_custom_call.1} parent=0
    _
  %s4 = ssub.s32 1, %s2
  %s5 = scalar_select 0, %s4, %s2
  $region1: #{tpu_custom_call.1} parent=0
    #allocation2 [shape = 'u8[8192]{0}', space=vmem, size = 0x2000, scoped, tag = 'input window, operand 0, single buffered']
    #allocation3 [shape = 's32[1]{0}', space=sflag, size = 0x4, scoped, tag = 'scoped memory for tpu_custom_call.1']
    #allocation4 [shape = 's32[1]{0}', space=sflag, size = 0x4, scoped, tag = 'scoped memory for tpu_custom_call.1']
    #allocation5 [shape = 'u8[8192]{0}', space=vmem, size = 0x2000, scoped, tag = 'output window, operand 0, single buffered']
    %6 = vsyncpa [#allocation3], 0
    %7 = vsyncpa [#allocation4], 0
    // Predicated region
    $region2: #{tpu_custom_call.1} parent=1 // pred_check
      _
    $region3: #{tpu_custom_call.1} parent=1 // pred_check_branch
      %9 = sbr.rel (0) target = $region5
    $region4: #{tpu_custom_call.1} parent=1 // pred_region
      %s11 = ssub.s32 256, 256
      %12 = vsyncadd [#allocation3], %s11
      %s13 = sshll.u32 [#allocation2], 4
      %s14 = int_to_ptr.vmem [resolvable:$true] %s13
      %19 = dma.hbm_to_vmem [thread:$0]  %s0, 256, %s14, [#allocation3], 128, 128, 8
    $region5: #{tpu_custom_call.1} parent=1 // pred_fallthru
      _
    // Predicated region
    $region6: #{tpu_custom_call.1} parent=1 // pred_check
      _
    $region7: #{tpu_custom_call.1} parent=1 // pred_check_branch
      %21 = sbr.rel (0) target = $region9
    $region8: #{tpu_custom_call.1} parent=1 // pred_region
      %22 = dma.done [#allocation3], 256
    $region9: #{tpu_custom_call.1} parent=1 // pred_fallthru
      _
    %v23 = vld [vmem:[#allocation2] sm:$0xff]
    %v24 = vld [vmem:[#allocation2 + $0x8] sm:$0xff]
    %v25 = vlaneseq
    %v26 = vshrl.u32 %v25, 7
    %v27 = vadd.s32 %v26, 8
    %vm28 = vcmp.lt.s32.totalorder %v26, 0
    %v29 = vsub.s32 0, %v26
    %v30 = vsel %vm28, %v29, %v26
    %v31 = vshrl.u32 %v30, 4
    %v32 = vand.u32 %v30, 15
    %v33 = vsub.s32 0, %v32
    %v34 = vsel %vm28, %v33, %v32
    %vm35 = vcmp.lt.s32.totalorder %v27, 0
    %v36 = vsub.s32 0, %v27
    %v37 = vsel %vm35, %v36, %v27
    %v38 = vshrl.u32 %v37, 4
    %v39 = vand.u32 %v37, 15
    %v40 = vsub.s32 0, %v39
    %v41 = vsel %vm35, %v40, %v39
    %vm42 = vcmp.ne.s32.totalorder %v34, 0
    %vm43 = vcmp.ne.s32.totalorder %v41, 0
    %vm44 = vcmp.lt.s32.totalorder %v34, 0
    %vm45 = vcmp.lt.s32.totalorder %v41, 0
    %vm46 = vmand %vm44, %vm42
    %vm47 = vmand %vm45, %vm43
    %v48 = vadd.s32 %v34, 16
    %v49 = vadd.s32 %v41, 16
    %v50 = vsel %vm46, %v48, %v34
    %v51 = vsel %vm47, %v49, %v41
    %v52 = vlaneseq
    %v53 = vand.u32 %v52, 127
    %vm54 = vcmp.lt.s32.totalorder %v53, 0
    %v55 = vsub.s32 0, %v53
    %v56 = vsel %vm54, %v55, %v53
    %v57 = vshrl.u32 %v56, 4
    %v58 = vand.u32 %v56, 15
    %v59 = vsub.s32 0, %v58
    %v60 = vsel %vm54, %v59, %v58
    %vm61 = vcmp.ne.s32.totalorder %v60, 0
    %vm62 = vcmp.lt.s32.totalorder %v60, 0
    %vm63 = vmand %vm62, %vm61
    %v64 = vadd.s32 %v60, 16
    %v65 = vsel %vm63, %v64, %v60
    %v66 = vadd.s32 %v50, 4294967295
    %v67 = vadd.s32 %v51, 4294967295
    %vm68 = vcmp.ge.s32.totalorder %v66, 0
    %vm69 = vcmp.ge.s32.totalorder %v67, 0
    %vm70 = vcmp.lt.s32.totalorder %v66, 16
    %vm71 = vcmp.lt.s32.totalorder %v67, 16
    %vm72 = vmand %vm68, %vm70
    %vm73 = vmand %vm69, %vm71
    %v74 = vsel %vm72, 1, 0
    %v75 = vsel %vm73, 1, 0
    %v76 = vcvt.s32.f32 %v74
    %v77 = vcvt.s32.f32 %v75
    %v79 = vrot.slane %v24, 7
    %vm82 = vcmask 1040384
    %v83 = vrot.slane %v23, 7
    %v84 = vsel %vm82, %v83, %v79
    %v87 = vsel %vm82, %v79, %v83
    %v88 = vmul.f32 %v87, %v76
    %v89 = vmul.f32 %v84, %v77
    %v90 = vadd.f32 %v23, %v88
    %v91 = vadd.f32 %v24, %v89
    %v92 = vadd.s32 %v50, 1
    %v93 = vadd.s32 %v51, 1
    %vm94 = vcmp.ge.s32.totalorder %v92, 0
    %vm95 = vcmp.ge.s32.totalorder %v93, 0
    %vm96 = vcmp.lt.s32.totalorder %v92, 16
    %vm97 = vcmp.lt.s32.totalorder %v93, 16
    %vm98 = vmand %vm94, %vm96
    %vm99 = vmand %vm95, %vm97
    %v100 = vsel %vm98, 1, 0
    %v101 = vsel %vm99, 1, 0
    %v102 = vcvt.s32.f32 %v100
    %v103 = vcvt.s32.f32 %v101
    %vm104 = vcmask 1046528
    %v105 = vrot.slane %v23, 1
    %v106 = vrot.slane %v24, 1
    %v107 = vsel %vm104, %v105, %v106
    %v111 = vsel %vm104, %v106, %v105
    %v112 = vmul.f32 %v107, %v102
    %v113 = vmul.f32 %v111, %v103
    %v114 = vadd.f32 %v90, %v112
    %v115 = vadd.f32 %v91, %v113
    %v116 = vadd.s32 %v65, 4294967295
    %vm117 = vcmp.ge.s32.totalorder %v116, 0
    %vm118 = vcmp.lt.s32.totalorder %v116, 16
    %vm119 = vmand %vm117, %vm118
    %v120 = vsel %vm119, 1, 0
    %v121 = vcvt.s32.f32 %v120
    %124 = vrot.lane.b32.xlu0 %v114, 1
    %v125 = vpop.permute.xlu0 %124
    %126 = vrot.lane.b32.xlu0 %v115, 1
    %v127 = vpop.permute.xlu0 %126
    %v130 = vmul.f32 %v125, %v121
    %v131 = vmul.f32 %v127, %v121
    %v132 = vadd.f32 %v114, %v130
    %v133 = vadd.f32 %v115, %v131
    %v134 = vadd.s32 %v65, 1
    %vm135 = vcmp.ge.s32.totalorder %v134, 0
    %vm136 = vcmp.lt.s32.totalorder %v134, 16
    %vm137 = vmand %vm135, %vm136
    %v138 = vsel %vm137, 1, 0
    %v139 = vcvt.s32.f32 %v138
    %140 = vrot.lane.b32.xlu0 %v114, 127
    %v141 = vpop.permute.xlu0 %140
    %142 = vrot.lane.b32.xlu0 %v115, 127
    %v143 = vpop.permute.xlu0 %142
    %v146 = vmul.f32 %v141, %v139
    %v147 = vmul.f32 %v143, %v139
    %v148 = vadd.f32 %v132, %v146
    %v149 = vadd.f32 %v133, %v147
    %v150 = vmul.f32 %v148, 0.11111111
    %v151 = vmul.f32 %v149, 0.11111111
    %v152 = vsub.f32 %v150, %v23
    %v153 = vsub.f32 %v151, %v24
    %154 = vst [vmem:[#allocation5] sm:$0xff] %v152
    %155 = vst [vmem:[#allocation5 + $0x8] sm:$0xff] %v153
    // Predicated region
    $region10: #{tpu_custom_call.1} parent=1 // pred_check
      _
    $region11: #{tpu_custom_call.1} parent=1 // pred_check_branch
      %157 = sbr.rel (0) target = $region13
    $region12: #{tpu_custom_call.1} parent=1 // pred_region
      %s159 = ssub.s32 256, 256
      %160 = vsyncadd [#allocation4], %s159
      %s161 = sshll.u32 [#allocation5], 4
      %s162 = int_to_ptr.vmem [resolvable:$true] %s161
      %167 = dma.vmem_to_hbm [thread:$0]  %s162, 256, %s1, [#allocation4], 128, 128, 8
    $region13: #{tpu_custom_call.1} parent=1 // pred_fallthru
      _
    // Predicated region
    $region14: #{tpu_custom_call.1} parent=1 // pred_check
      _
    $region15: #{tpu_custom_call.1} parent=1 // pred_check_branch
      %169 = sbr.rel (0) target = $region17
    $region16: #{tpu_custom_call.1} parent=1 // pred_region
      %170 = dma.done [#allocation4], 256
    $region17: #{tpu_custom_call.1} parent=1 // pred_fallthru
      _
    %171 = vsyncpa [#allocation3], 1
    %172 = vsyncpa [#allocation4], 1

</llo_original>
